<compile_context>
chip_gen: v7x
topology: tpu7x:2x2x1
jax: 0.10.0
libtpu: 0.0.40
codegen_flags: <defaults>
</compile_context>

<pallas_src>
import jax
import jax.numpy as jnp
from jax.experimental import pallas as pl
from jax.experimental.pallas import tpu as pltpu

EPS = 1e-5

# Single packed parameter slab, shape (96, 15):
#   w1 : rows  0:64, cols 0:15   (Linear 64 -> 15, stored (in, out))
#   w2 : rows 64:79, cols 0:10   (Linear 15 -> 10)
#   w3 : rows 80:90, cols 0:10   (Linear 10 -> 10)
#   g1 : row 90, cols 0:15 ; be1: row 91, cols 0:15
#   g2 : row 92, cols 0:10 ; be2: row 93, cols 0:10
#   g3 : row 94, cols 0:10 ; be3: row 95, cols 0:10
_SLAB_ROWS = 96
_SLAB_COLS = 15


def _bn_train_fused(z, gamma, beta):
    """BatchNorm1d, training mode. Two-pass (centered) variance for numerical safety,
    fused affine: h = (z - mean) * (gamma * rsqrt(var + eps)) + beta."""
    mean = jnp.mean(z, axis=0, keepdims=True)            # (1, F)
    c = z - mean                                         # (B, F)
    var = jnp.mean(c * c, axis=0, keepdims=True)         # (1, F)
    scale = gamma * jax.lax.rsqrt(var + EPS)             # (1, F)
    return c * scale + beta


def classifier_kernel(x_ref, p_ref, out_ref):
    x = x_ref[...]          # (B, 64) f32
    p = p_ref[...]          # (96, 15) packed weights + BN params

    w1 = p[0:64, 0:15]      # (64, 15)
    w2 = p[64:79, 0:10]     # (15, 10)
    w3 = p[80:90, 0:10]     # (10, 10)

    g1, be1 = p[90:91, 0:15], p[91:92, 0:15]
    g2, be2 = p[92:93, 0:10], p[93:94, 0:10]
    g3, be3 = p[94:95, 0:10], p[95:96, 0:10]

    # Layer 1: Linear(64 -> 15) [bias folded away by train-mode BN] + BN + ReLU
    z1 = jnp.dot(x, w1, preferred_element_type=jnp.float32)
    h1 = jnp.maximum(_bn_train_fused(z1, g1, be1), 0.0)

    # Layer 2: Linear(15 -> 10) + BN + ReLU
    z2 = jnp.dot(h1, w2, preferred_element_type=jnp.float32)
    h2 = jnp.maximum(_bn_train_fused(z2, g2, be2), 0.0)

    # Layer 3: Linear(10 -> 10) + BN + softmax(dim=1)
    z3 = jnp.dot(h2, w3, preferred_element_type=jnp.float32)
    h3 = _bn_train_fused(z3, g3, be3)

    m = jnp.max(h3, axis=1, keepdims=True)
    e = jnp.exp(h3 - m)
    denom = jnp.sum(e, axis=1, keepdims=True)
    r = pl.reciprocal(denom, approx=True)   # EUP slot
    r = r * (2.0 - denom * r)               # one Newton step -> ~f32 accuracy
    out_ref[...] = (e * r).astype(out_ref.dtype)


def pack_params(params):
    """Pack Linear weights (biases dropped; train-mode BN absorbs them) and BN
    gamma/beta into one (96, 15) slab. Call ONCE and reuse the result."""
    slab = jnp.zeros((_SLAB_ROWS, _SLAB_COLS), jnp.float32)
    slab = slab.at[0:64, 0:15].set(params["w1"])
    slab = slab.at[64:79, 0:10].set(params["w2"])
    slab = slab.at[80:90, 0:10].set(params["w3"])
    slab = slab.at[90, 0:15].set(params["g1"])
    slab = slab.at[91, 0:15].set(params["be1"])
    slab = slab.at[92, 0:10].set(params["g2"])
    slab = slab.at[93, 0:10].set(params["be2"])
    slab = slab.at[94, 0:10].set(params["g3"])
    slab = slab.at[95, 0:10].set(params["be3"])
    return slab


@jax.jit
def classifier_forward(encoded, param_slab):
    """encoded: (B, 64). param_slab: pre-packed (96, 15) slab from pack_params()."""
    encoded = encoded.astype(jnp.float32)
    B = encoded.shape[0]
    vmem = pl.BlockSpec(memory_space=pltpu.MemorySpace.VMEM)
    return pl.pallas_call(
        classifier_kernel,
        out_shape=jax.ShapeDtypeStruct((B, 10), jnp.float32),
        in_specs=[vmem, vmem],
        out_specs=vmem,
    )(encoded, param_slab)


def init_params(key):
    """PyTorch-style init. Linear: uniform(-1/sqrt(fan_in), +). BN: gamma=1, beta=0."""
    def linear(key, fan_in, fan_out):
        kw, kb = jax.random.split(key)
        bound = 1.0 / jnp.sqrt(fan_in)
        # stored as (in, out) == W.T relative to PyTorch's (out, in)
        w = jax.random.uniform(kw, (fan_in, fan_out), jnp.float32, -bound, bound)
        b = jax.random.uniform(kb, (fan_out,), jnp.float32, -bound, bound)
        return w, b

    k1, k2, k3 = jax.random.split(key, 3)
    w1, b1 = linear(k1, 64, 15)
    w2, b2 = linear(k2, 15, 10)
    w3, b3 = linear(k3, 10, 10)
    return {
        "w1": w1, "b1": b1, "g1": jnp.ones((15,), jnp.float32), "be1": jnp.zeros((15,), jnp.float32),
        "w2": w2, "b2": b2, "g2": jnp.ones((10,), jnp.float32), "be2": jnp.zeros((10,), jnp.float32),
        "w3": w3, "b3": b3, "g3": jnp.ones((10,), jnp.float32), "be3": jnp.zeros((10,), jnp.float32),
    }


def reference_forward(x, params):
    """Pure-JAX reference mirroring the PyTorch forward exactly (biases kept,
    training-mode BN with two-pass variance)."""
    enc = x[0].astype(jnp.float32)

    def bn(z, g, b):
        m = jnp.mean(z, axis=0, keepdims=True)
        v = jnp.mean((z - m) ** 2, axis=0, keepdims=True)
        return (z - m) / jnp.sqrt(v + EPS) * g + b

    h = jax.nn.relu(bn(enc @ params["w1"] + params["b1"], params["g1"], params["be1"]))
    h = jax.nn.relu(bn(h @ params["w2"] + params["b2"], params["g2"], params["be2"]))
    h = bn(h @ params["w3"] + params["b3"], params["g3"], params["be3"])
    return jax.nn.softmax(h, axis=1)


if __name__ == "__main__":
    key = jax.random.PRNGKey(0)
    k_params, k_enc, k_lbl = jax.random.split(key, 3)

    params = init_params(k_params)
    param_slab = jax.block_until_ready(pack_params(params))   # packed ONCE, reused

    B = 8
    encoded = jax.random.normal(k_enc, (B, 64), jnp.float32)
    labels = jax.random.randint(k_lbl, (B,), 0, 10)  # unused second element of x
    x = (encoded, labels)

    out = classifier_forward(encoded, param_slab)
    out = jax.block_until_ready(out)

    ref = reference_forward(x, params)
    assert out.shape == (B, 10)
    assert jnp.allclose(jnp.sum(out, axis=1), 1.0, atol=1e-5)
    assert jnp.allclose(out, ref, atol=3e-5, rtol=1e-5), float(jnp.max(jnp.abs(out - ref)))

    print("KERNEL_OK")
</pallas_src>

<mosaic_0001>
module attributes {stable_mosaic.version = 11 : i64} {
  func.func @classifier_kernel(%arg0: memref<8x64xf32, #tpu.memory_space<vmem>>, %arg1: memref<96x15xf32, #tpu.memory_space<vmem>>, %arg2: memref<8x10xf32, #tpu.memory_space<vmem>>) attributes {dimension_semantics = [], scalar_prefetch = 0 : i64, scratch_operands = 0 : i64, tpu.core_type = #tpu.core_type<tc>} {
    %c0 = arith.constant 0 : index
    %c0_0 = arith.constant 0 : index
    %0 = vector.load %arg0[%c0, %c0_0] : memref<8x64xf32, #tpu.memory_space<vmem>>, vector<8x64xf32>
    %c0_1 = arith.constant 0 : index
    %c0_2 = arith.constant 0 : index
    %1 = vector.load %arg1[%c0_1, %c0_2] : memref<96x15xf32, #tpu.memory_space<vmem>>, vector<96x15xf32>
    %2 = vector.extract_strided_slice %1 {offsets = [0, 0], sizes = [64, 15], strides = [1, 1]} : vector<96x15xf32> to vector<64x15xf32>
    %3 = vector.extract_strided_slice %1 {offsets = [64, 0], sizes = [15, 10], strides = [1, 1]} : vector<96x15xf32> to vector<15x10xf32>
    %4 = vector.extract_strided_slice %1 {offsets = [80, 0], sizes = [10, 10], strides = [1, 1]} : vector<96x15xf32> to vector<10x10xf32>
    %5 = vector.extract_strided_slice %1 {offsets = [90, 0], sizes = [1, 15], strides = [1, 1]} : vector<96x15xf32> to vector<1x15xf32>
    %6 = vector.extract_strided_slice %1 {offsets = [91, 0], sizes = [1, 15], strides = [1, 1]} : vector<96x15xf32> to vector<1x15xf32>
    %7 = vector.extract_strided_slice %1 {offsets = [92, 0], sizes = [1, 10], strides = [1, 1]} : vector<96x15xf32> to vector<1x10xf32>
    %8 = vector.extract_strided_slice %1 {offsets = [93, 0], sizes = [1, 10], strides = [1, 1]} : vector<96x15xf32> to vector<1x10xf32>
    %9 = vector.extract_strided_slice %1 {offsets = [94, 0], sizes = [1, 10], strides = [1, 1]} : vector<96x15xf32> to vector<1x10xf32>
    %10 = vector.extract_strided_slice %1 {offsets = [95, 0], sizes = [1, 10], strides = [1, 1]} : vector<96x15xf32> to vector<1x10xf32>
    %cst = arith.constant dense<0.000000e+00> : vector<8x15xf32>
    %11 = tpu.matmul %0, %2, %cst {dimension_numbers = #tpu.dot_dimension_numbers<[1], [0], [0], [1], [0, 0, 1, 1], [], []>} : vector<8x64xf32>, vector<64x15xf32>, vector<8x15xf32> -> vector<8x15xf32>
    %cst_3 = arith.constant dense<0.000000e+00> : vector<15xf32>
    %12 = vector.multi_reduction <add>, %11, %cst_3 [0] : vector<8x15xf32> to vector<15xf32>
    %13 = vector.shape_cast %12 : vector<15xf32> to vector<1x15xf32>
    %cst_4 = arith.constant 8.000000e+00 : f32
    %14 = vector.broadcast %cst_4 : f32 to vector<1x15xf32>
    %15 = arith.divf %13, %14 : vector<1x15xf32>
    %16 = vector.broadcast %15 : vector<1x15xf32> to vector<8x15xf32>
    %17 = arith.subf %11, %16 : vector<8x15xf32>
    %18 = arith.mulf %17, %17 : vector<8x15xf32>
    %cst_5 = arith.constant dense<0.000000e+00> : vector<15xf32>
    %19 = vector.multi_reduction <add>, %18, %cst_5 [0] : vector<8x15xf32> to vector<15xf32>
    %20 = vector.shape_cast %19 : vector<15xf32> to vector<1x15xf32>
    %cst_6 = arith.constant 8.000000e+00 : f32
    %21 = vector.broadcast %cst_6 : f32 to vector<1x15xf32>
    %22 = arith.divf %20, %21 : vector<1x15xf32>
    %cst_7 = arith.constant 9.99999974E-6 : f32
    %23 = vector.broadcast %cst_7 : f32 to vector<1x15xf32>
    %24 = arith.addf %22, %23 : vector<1x15xf32>
    %25 = math.rsqrt %24 : vector<1x15xf32>
    %26 = arith.mulf %5, %25 : vector<1x15xf32>
    %27 = vector.broadcast %26 : vector<1x15xf32> to vector<8x15xf32>
    %28 = arith.mulf %17, %27 : vector<8x15xf32>
    %29 = vector.broadcast %6 : vector<1x15xf32> to vector<8x15xf32>
    %30 = arith.addf %28, %29 : vector<8x15xf32>
    %cst_8 = arith.constant 0.000000e+00 : f32
    %31 = vector.broadcast %cst_8 : f32 to vector<8x15xf32>
    %32 = arith.maximumf %30, %31 : vector<8x15xf32>
    %cst_9 = arith.constant dense<0.000000e+00> : vector<8x10xf32>
    %33 = tpu.matmul %32, %3, %cst_9 {dimension_numbers = #tpu.dot_dimension_numbers<[1], [0], [0], [1], [0, 0, 1, 1], [], []>} : vector<8x15xf32>, vector<15x10xf32>, vector<8x10xf32> -> vector<8x10xf32>
    %cst_10 = arith.constant dense<0.000000e+00> : vector<10xf32>
    %34 = vector.multi_reduction <add>, %33, %cst_10 [0] : vector<8x10xf32> to vector<10xf32>
    %35 = vector.shape_cast %34 : vector<10xf32> to vector<1x10xf32>
    %cst_11 = arith.constant 8.000000e+00 : f32
    %36 = vector.broadcast %cst_11 : f32 to vector<1x10xf32>
    %37 = arith.divf %35, %36 : vector<1x10xf32>
    %38 = vector.broadcast %37 : vector<1x10xf32> to vector<8x10xf32>
    %39 = arith.subf %33, %38 : vector<8x10xf32>
    %40 = arith.mulf %39, %39 : vector<8x10xf32>
    %cst_12 = arith.constant dense<0.000000e+00> : vector<10xf32>
    %41 = vector.multi_reduction <add>, %40, %cst_12 [0] : vector<8x10xf32> to vector<10xf32>
    %42 = vector.shape_cast %41 : vector<10xf32> to vector<1x10xf32>
    %cst_13 = arith.constant 8.000000e+00 : f32
    %43 = vector.broadcast %cst_13 : f32 to vector<1x10xf32>
    %44 = arith.divf %42, %43 : vector<1x10xf32>
    %cst_14 = arith.constant 9.99999974E-6 : f32
    %45 = vector.broadcast %cst_14 : f32 to vector<1x10xf32>
    %46 = arith.addf %44, %45 : vector<1x10xf32>
    %47 = math.rsqrt %46 : vector<1x10xf32>
    %48 = arith.mulf %7, %47 : vector<1x10xf32>
    %49 = vector.broadcast %48 : vector<1x10xf32> to vector<8x10xf32>
    %50 = arith.mulf %39, %49 : vector<8x10xf32>
    %51 = vector.broadcast %8 : vector<1x10xf32> to vector<8x10xf32>
    %52 = arith.addf %50, %51 : vector<8x10xf32>
    %cst_15 = arith.constant 0.000000e+00 : f32
    %53 = vector.broadcast %cst_15 : f32 to vector<8x10xf32>
    %54 = arith.maximumf %52, %53 : vector<8x10xf32>
    %cst_16 = arith.constant dense<0.000000e+00> : vector<8x10xf32>
    %55 = tpu.matmul %54, %4, %cst_16 {dimension_numbers = #tpu.dot_dimension_numbers<[1], [0], [0], [1], [0, 0, 1, 1], [], []>} : vector<8x10xf32>, vector<10x10xf32>, vector<8x10xf32> -> vector<8x10xf32>
    %cst_17 = arith.constant dense<0.000000e+00> : vector<10xf32>
    %56 = vector.multi_reduction <add>, %55, %cst_17 [0] : vector<8x10xf32> to vector<10xf32>
    %57 = vector.shape_cast %56 : vector<10xf32> to vector<1x10xf32>
    %cst_18 = arith.constant 8.000000e+00 : f32
    %58 = vector.broadcast %cst_18 : f32 to vector<1x10xf32>
    %59 = arith.divf %57, %58 : vector<1x10xf32>
    %60 = vector.broadcast %59 : vector<1x10xf32> to vector<8x10xf32>
    %61 = arith.subf %55, %60 : vector<8x10xf32>
    %62 = arith.mulf %61, %61 : vector<8x10xf32>
    %cst_19 = arith.constant dense<0.000000e+00> : vector<10xf32>
    %63 = vector.multi_reduction <add>, %62, %cst_19 [0] : vector<8x10xf32> to vector<10xf32>
    %64 = vector.shape_cast %63 : vector<10xf32> to vector<1x10xf32>
    %cst_20 = arith.constant 8.000000e+00 : f32
    %65 = vector.broadcast %cst_20 : f32 to vector<1x10xf32>
    %66 = arith.divf %64, %65 : vector<1x10xf32>
    %cst_21 = arith.constant 9.99999974E-6 : f32
    %67 = vector.broadcast %cst_21 : f32 to vector<1x10xf32>
    %68 = arith.addf %66, %67 : vector<1x10xf32>
    %69 = math.rsqrt %68 : vector<1x10xf32>
    %70 = arith.mulf %9, %69 : vector<1x10xf32>
    %71 = vector.broadcast %70 : vector<1x10xf32> to vector<8x10xf32>
    %72 = arith.mulf %61, %71 : vector<8x10xf32>
    %73 = vector.broadcast %10 : vector<1x10xf32> to vector<8x10xf32>
    %74 = arith.addf %72, %73 : vector<8x10xf32>
    %cst_22 = arith.constant dense<0xFF800000> : vector<8xf32>
    %75 = vector.multi_reduction <maximumf>, %74, %cst_22 [1] : vector<8x10xf32> to vector<8xf32>
    %76 = vector.shape_cast %75 : vector<8xf32> to vector<8x1xf32>
    %77 = vector.broadcast %76 : vector<8x1xf32> to vector<8x10xf32>
    %78 = arith.subf %74, %77 : vector<8x10xf32>
    %79 = math.exp %78 : vector<8x10xf32>
    %cst_23 = arith.constant dense<0.000000e+00> : vector<8xf32>
    %80 = vector.multi_reduction <add>, %79, %cst_23 [1] : vector<8x10xf32> to vector<8xf32>
    %81 = vector.shape_cast %80 : vector<8xf32> to vector<8x1xf32>
    %82 = tpu.reciprocal %81 {approx = true} : vector<8x1xf32> -> vector<8x1xf32>
    %83 = arith.mulf %81, %82 : vector<8x1xf32>
    %cst_24 = arith.constant 2.000000e+00 : f32
    %84 = vector.broadcast %cst_24 : f32 to vector<8x1xf32>
    %85 = arith.subf %84, %83 : vector<8x1xf32>
    %86 = arith.mulf %82, %85 : vector<8x1xf32>
    %87 = vector.broadcast %86 : vector<8x1xf32> to vector<8x10xf32>
    %88 = arith.mulf %79, %87 : vector<8x10xf32>
    %c0_25 = arith.constant 0 : index
    %c0_26 = arith.constant 0 : index
    %89 = vector.load %arg2[%c0_25, %c0_26] : memref<8x10xf32, #tpu.memory_space<vmem>>, vector<8x10xf32>
    tpu.vector_store %arg2[%c0_25, %c0_26], %88 {strides = array<i32>} : memref<8x10xf32, #tpu.memory_space<vmem>>, vector<8x10xf32>,
    return
  }
}

</mosaic_0001>

<llo_original>
// kernel: classifier_forward.1
$region0: #{classifier_forward.1}
  #allocation0 [shape = 'u32[]', space=smem, size = 0x4, offset = 0x4, fixed_abs, tag = 'smem constant byte address 0x4 - core index']
  #allocation1 [shape = 'u32[144,128]{1,0:T(1,128)}', space=vmem, size = 0x12000, scoped, tag = 'internal scratch']
  %s0 = inlined_call_operand.vmem [shape: f32[8,64], index: 0, kind: input, shape index: {}]
  %s1 = inlined_call_operand.vmem [shape: f32[96,15], index: 1, kind: input, shape index: {}]
  %s2 = inlined_call_operand.hbm [shape: f32[8,10], index: 2, kind: output, shape index: {}]
  %s3 = sld [smem:[#allocation0]]
  $region18: #{classifier_forward.1} parent=0
    _
  %s5 = ssub.s32 1, %s3
  %s6 = scalar_select 0, %s5, %s3
  $region1: #{classifier_forward.1} parent=0
    #allocation2 [shape = 'u8[4096]{0}', space=vmem, size = 0x1000, scoped, tag = 'output window, operand 0, single buffered']
    #allocation3 [shape = 's32[1]{0}', space=sflag, size = 0x4, scoped, tag = 'scoped memory for classifier_forward.1']
    %7 = vsyncpa [#allocation3], 0
    // Predicated region
    $region2: #{classifier_forward.1} parent=1 // pred_check
      _
    $region3: #{classifier_forward.1} parent=1 // pred_check_branch
      %9 = sbr.rel (0) target = $region5
    $region4: #{classifier_forward.1} parent=1 // pred_region
      _
    $region5: #{classifier_forward.1} parent=1 // pred_fallthru
      _
    // Predicated region
    $region6: #{classifier_forward.1} parent=1 // pred_check
      _
    $region7: #{classifier_forward.1} parent=1 // pred_check_branch
      %11 = sbr.rel (0) target = $region9
    $region8: #{classifier_forward.1} parent=1 // pred_region
      _
    $region9: #{classifier_forward.1} parent=1 // pred_fallthru
      _
    %v12 = vld [vmem:[%s0] sm:$0xff]
    %v13 = vld [vmem:[%s1] sm:$0xff]
    %v14 = vld [vmem:[%s1 + $0x8] sm:$0xff]
    %v15 = vld [vmem:[%s1 + $0x10] sm:$0xff]
    %v16 = vld [vmem:[%s1 + $0x18] sm:$0xff]
    %v17 = vld [vmem:[%s1 + $0x20] sm:$0xff]
    %v18 = vld [vmem:[%s1 + $0x28] sm:$0xff]
    %v19 = vld [vmem:[%s1 + $0x30] sm:$0xff]
    %v20 = vld [vmem:[%s1 + $0x38] sm:$0xff]
    %v21 = vld [vmem:[%s1 + $0x40] sm:$0xff]
    %v22 = vld [vmem:[%s1 + $0x48] sm:$0xff]
    %v23 = vld [vmem:[%s1 + $0x50] sm:$0xff]
    %v24 = vld [vmem:[%s1 + $0x58] sm:$0xff]
    %vm25 = vcmask 523264
    %v27 = vsel %vm25, %v12, 0
    %29 = vmatprep.subr.mxu0 0.0
    %30 = vmatpush1.msra.mxu0 %v13
    %31 = vmatprep.subr.mxu0 0.0
    %32 = vmatpush1.msra.mxu0 %v14
    %33 = vmatprep.subr.mxu0 0.0
    %34 = vmatpush1.msra.mxu0 %v15
    %35 = vmatprep.subr.mxu0 0.0
    %36 = vmatpush1.msra.mxu0 %v16
    %37 = vmatprep.subr.mxu0 0.0
    %38 = vmatpush1.msra.mxu0 %v17
    %39 = vmatprep.subr.mxu0 0.0
    %40 = vmatpush1.msra.mxu0 %v18
    %41 = vmatprep.subr.mxu0 0.0
    %42 = vmatpush1.msra.mxu0 %v19
    %43 = vmatprep.subr.mxu0 0.0
    %44 = vmatpush1.msra.mxu0 %v20
    %45 = vmatprep.subr.mxu0 0.0
    %46 = vmatpush1.msra.mxu0 0.0
    %47 = vmatprep.subr.mxu0 0.0
    %48 = vmatpush1.msra.mxu0 0.0
    %49 = vmatprep.subr.mxu0 0.0
    %50 = vmatpush1.msra.mxu0 0.0
    %51 = vmatprep.subr.mxu0 0.0
    %52 = vmatpush1.msra.mxu0 0.0
    %53 = vmatprep.subr.mxu0 0.0
    %54 = vmatpush1.msra.mxu0 0.0
    %55 = vmatprep.subr.mxu0 0.0
    %56 = vmatpush1.msra.mxu0 0.0
    %57 = vmatprep.subr.mxu0 0.0
    %58 = vmatpush1.msra.mxu0 0.0
    %59 = vmatprep.subr.mxu0 0.0
    %60 = vmatpush1.msra.mxu0 0.0
    %61 = vmatprep.subr.mxu0 0.0
    %62 = vmatpush1.msra.mxu0 0.0
    %63 = vmatprep.subr.mxu0 0.0
    %64 = vmatpush1.msra.mxu0 0.0
    %65 = vmatprep.subr.mxu0 0.0
    %66 = vmatpush1.msra.mxu0 0.0
    %67 = vmatprep.subr.mxu0 0.0
    %68 = vmatpush1.msra.mxu0 0.0
    %69 = vmatprep.subr.mxu0 0.0
    %70 = vmatpush1.msra.mxu0 0.0
    %71 = vmatprep.subr.mxu0 0.0
    %72 = vmatpush1.msra.mxu0 0.0
    %73 = vmatprep.subr.mxu0 0.0
    %74 = vmatpush1.msra.mxu0 0.0
    %75 = vmatprep.subr.mxu0 0.0
    %76 = vmatpush1.msra.mxu0 0.0
    %77 = vmatprep.subr.mxu0 0.0
    %78 = vmatpush1.msra.mxu0 0.0
    %79 = vmatprep.subr.mxu0 0.0
    %80 = vmatpush1.msra.mxu0 0.0
    %81 = vmatprep.subr.mxu0 0.0
    %82 = vmatpush1.msra.mxu0 0.0
    %83 = vmatprep.subr.mxu0 0.0
    %84 = vmatpush1.msra.mxu0 0.0
    %85 = vmatprep.subr.mxu0 0.0
    %86 = vmatpush1.msra.mxu0 0.0
    %87 = vmatprep.subr.mxu0 0.0
    %88 = vmatpush1.msra.mxu0 0.0
    %89 = vmatprep.subr.mxu0 0.0
    %90 = vmatpush1.msra.mxu0 0.0
    %91 = vmatprep.subr.mxu0 0.0
    %92 = vmatpush1.msra.mxu0 0.0
    %93 = vmatprep.mubr.f32.mxu0 0.0
    %94 = vmatmul.mubr.f32.gmra.mrb[0].mxu0 %v27
    %v95 = vpop.f32.mrb[0].mxu0
    %v96 = vadd.f32 0.0, %v95
    %v97 = vpop.f32.mrb[0].mxu0
    %98 = vdwg.mxu0
    %vm99 = vcmask 121856
    %v100 = vsel %vm99, %v96, 0.0
    %v101 = vrot.slane %v100, 4
    %v102 = vadd.f32 %v100, %v101
    %v103 = vrot.slane %v102, 2
    %v104 = vadd.f32 %v102, %v103
    %v105 = vrot.slane %v104, 1
    %v106 = vadd.f32 %v104, %v105
    %v107 = vrcp.pop 8.0
    %v108 = vmul.f32 %v106, %v107
    %v109 = vsub.f32 %v96, %v108
    %v110 = vmul.f32 %v109, %v109
    %v111 = vsel %vm99, %v110, 0.0
    %v112 = vrot.slane %v111, 4
    %v113 = vadd.f32 %v111, %v112
    %v114 = vrot.slane %v113, 2
    %v115 = vadd.f32 %v113, %v114
    %v116 = vrot.slane %v115, 1
    %v117 = vadd.f32 %v115, %v116
    %v118 = vmul.f32 %v117, %v107
    %v119 = vadd.f32 %v118, 1e-05
    %v120 = vrsqrt.pop %v119
    %v121 = vmul.f32 %v24, %v120
    %v122 = vlaneseq
    %v123 = vshrl.u32 %v122, 7
    %v124 = vsub.s32 2, %v123
    %v125 = vrot.slane %v121, %v124
    %v126 = vmul.f32 %v109, %v125
    %v127 = vlaneseq
    %v128 = vshrl.u32 %v127, 7
    %v129 = vsub.s32 3, %v128
    %v130 = vrot.slane %v24, %v129
    %v131 = vadd.f32 %v126, %v130
    %v132 = vmax.f32 %v131, 0.0
    %v134 = vsel %vm99, %v132, 0
    %vm136 = vcmask 1046528
    %v138 = vsel %vm136, %v22, 0
    %140 = vmatprep.subr.mxu0 0.0
    %141 = vmatpush1.msra.mxu0 %v21
    %142 = vmatprep.subr.mxu0 0.0
    %143 = vmatpush1.msra.mxu0 %v138
    %144 = vmatprep.subr.mxu0 0.0
    %145 = vmatpush1.msra.mxu0 0.0
    %146 = vmatprep.subr.mxu0 0.0
    %147 = vmatpush1.msra.mxu0 0.0
    %148 = vmatprep.subr.mxu0 0.0
    %149 = vmatpush1.msra.mxu0 0.0
    %150 = vmatprep.subr.mxu0 0.0
    %151 = vmatpush1.msra.mxu0 0.0
    %152 = vmatprep.subr.mxu0 0.0
    %153 = vmatpush1.msra.mxu0 0.0
    %154 = vmatprep.subr.mxu0 0.0
    %155 = vmatpush1.msra.mxu0 0.0
    %156 = vmatprep.subr.mxu0 0.0
    %157 = vmatpush1.msra.mxu0 0.0
    %158 = vmatprep.subr.mxu0 0.0
    %159 = vmatpush1.msra.mxu0 0.0
    %160 = vmatprep.subr.mxu0 0.0
    %161 = vmatpush1.msra.mxu0 0.0
    %162 = vmatprep.subr.mxu0 0.0
    %163 = vmatpush1.msra.mxu0 0.0
    %164 = vmatprep.subr.mxu0 0.0
    %165 = vmatpush1.msra.mxu0 0.0
    %166 = vmatprep.subr.mxu0 0.0
    %167 = vmatpush1.msra.mxu0 0.0
    %168 = vmatprep.subr.mxu0 0.0
    %169 = vmatpush1.msra.mxu0 0.0
    %170 = vmatprep.subr.mxu0 0.0
    %171 = vmatpush1.msra.mxu0 0.0
    %172 = vmatprep.subr.mxu0 0.0
    %173 = vmatpush1.msra.mxu0 0.0
    %174 = vmatprep.subr.mxu0 0.0
    %175 = vmatpush1.msra.mxu0 0.0
    %176 = vmatprep.subr.mxu0 0.0
    %177 = vmatpush1.msra.mxu0 0.0
    %178 = vmatprep.subr.mxu0 0.0
    %179 = vmatpush1.msra.mxu0 0.0
    %180 = vmatprep.subr.mxu0 0.0
    %181 = vmatpush1.msra.mxu0 0.0
    %182 = vmatprep.subr.mxu0 0.0
    %183 = vmatpush1.msra.mxu0 0.0
    %184 = vmatprep.subr.mxu0 0.0
    %185 = vmatpush1.msra.mxu0 0.0
    %186 = vmatprep.subr.mxu0 0.0
    %187 = vmatpush1.msra.mxu0 0.0
    %188 = vmatprep.subr.mxu0 0.0
    %189 = vmatpush1.msra.mxu0 0.0
    %190 = vmatprep.subr.mxu0 0.0
    %191 = vmatpush1.msra.mxu0 0.0
    %192 = vmatprep.subr.mxu0 0.0
    %193 = vmatpush1.msra.mxu0 0.0
    %194 = vmatprep.subr.mxu0 0.0
    %195 = vmatpush1.msra.mxu0 0.0
    %196 = vmatprep.subr.mxu0 0.0
    %197 = vmatpush1.msra.mxu0 0.0
    %198 = vmatprep.subr.mxu0 0.0
    %199 = vmatpush1.msra.mxu0 0.0
    %200 = vmatprep.subr.mxu0 0.0
    %201 = vmatpush1.msra.mxu0 0.0
    %202 = vmatprep.subr.mxu0 0.0
    %203 = vmatpush1.msra.mxu0 0.0
    %204 = vmatprep.mubr.f32.mxu0 0.0
    %205 = vmatmul.mubr.f32.gmra.mrb[0].mxu0 %v134
    %v206 = vpop.f32.mrb[0].mxu0
    %v207 = vadd.f32 0.0, %v206
    %v208 = vpop.f32.mrb[0].mxu0
    %209 = vdwg.mxu0
    %vm210 = vcmask 80896
    %v211 = vsel %vm210, %v207, 0.0
    %v212 = vrot.slane %v211, 4
    %v213 = vadd.f32 %v211, %v212
    %v214 = vrot.slane %v213, 2
    %v215 = vadd.f32 %v213, %v214
    %v216 = vrot.slane %v215, 1
    %v217 = vadd.f32 %v215, %v216
    %v218 = vmul.f32 %v217, %v107
    %v219 = vsub.f32 %v207, %v218
    %v220 = vmul.f32 %v219, %v219
    %v221 = vsel %vm210, %v220, 0.0
    %v222 = vrot.slane %v221, 4
    %v223 = vadd.f32 %v221, %v222
    %v224 = vrot.slane %v223, 2
    %v225 = vadd.f32 %v223, %v224
    %v226 = vrot.slane %v225, 1
    %v227 = vadd.f32 %v225, %v226
    %v228 = vmul.f32 %v227, %v107
    %v229 = vadd.f32 %v228, 1e-05
    %v230 = vrsqrt.pop %v229
    %v231 = vmul.f32 %v24, %v230
    %v232 = vlaneseq
    %v233 = vshrl.u32 %v232, 7
    %v234 = vsub.s32 4, %v233
    %v235 = vrot.slane %v231, %v234
    %v236 = vmul.f32 %v219, %v235
    %v237 = vlaneseq
    %v238 = vshrl.u32 %v237, 7
    %v239 = vsub.s32 5, %v238
    %v240 = vrot.slane %v24, %v239
    %v241 = vadd.f32 %v236, %v240
    %v242 = vmax.f32 %v241, 0.0
    %v244 = vsel %vm210, %v242, 0
    %vm246 = vcmask 1041408
    %v248 = vsel %vm246, %v24, 0
    %250 = vmatprep.subr.mxu0 0.0
    %251 = vmatpush1.msra.mxu0 %v23
    %252 = vmatprep.subr.mxu0 0.0
    %253 = vmatpush1.msra.mxu0 %v248
    %254 = vmatprep.subr.mxu0 0.0
    %255 = vmatpush1.msra.mxu0 0.0
    %256 = vmatprep.subr.mxu0 0.0
    %257 = vmatpush1.msra.mxu0 0.0
    %258 = vmatprep.subr.mxu0 0.0
    %259 = vmatpush1.msra.mxu0 0.0
    %260 = vmatprep.subr.mxu0 0.0
    %261 = vmatpush1.msra.mxu0 0.0
    %262 = vmatprep.subr.mxu0 0.0
    %263 = vmatpush1.msra.mxu0 0.0
    %264 = vmatprep.subr.mxu0 0.0
    %265 = vmatpush1.msra.mxu0 0.0
    %266 = vmatprep.subr.mxu0 0.0
    %267 = vmatpush1.msra.mxu0 0.0
    %268 = vmatprep.subr.mxu0 0.0
    %269 = vmatpush1.msra.mxu0 0.0
    %270 = vmatprep.subr.mxu0 0.0
    %271 = vmatpush1.msra.mxu0 0.0
    %272 = vmatprep.subr.mxu0 0.0
    %273 = vmatpush1.msra.mxu0 0.0
    %274 = vmatprep.subr.mxu0 0.0
    %275 = vmatpush1.msra.mxu0 0.0
    %276 = vmatprep.subr.mxu0 0.0
    %277 = vmatpush1.msra.mxu0 0.0
    %278 = vmatprep.subr.mxu0 0.0
    %279 = vmatpush1.msra.mxu0 0.0
    %280 = vmatprep.subr.mxu0 0.0
    %281 = vmatpush1.msra.mxu0 0.0
    %282 = vmatprep.subr.mxu0 0.0
    %283 = vmatpush1.msra.mxu0 0.0
    %284 = vmatprep.subr.mxu0 0.0
    %285 = vmatpush1.msra.mxu0 0.0
    %286 = vmatprep.subr.mxu0 0.0
    %287 = vmatpush1.msra.mxu0 0.0
    %288 = vmatprep.subr.mxu0 0.0
    %289 = vmatpush1.msra.mxu0 0.0
    %290 = vmatprep.subr.mxu0 0.0
    %291 = vmatpush1.msra.mxu0 0.0
    %292 = vmatprep.subr.mxu0 0.0
    %293 = vmatpush1.msra.mxu0 0.0
    %294 = vmatprep.subr.mxu0 0.0
    %295 = vmatpush1.msra.mxu0 0.0
    %296 = vmatprep.subr.mxu0 0.0
    %297 = vmatpush1.msra.mxu0 0.0
    %298 = vmatprep.subr.mxu0 0.0
    %299 = vmatpush1.msra.mxu0 0.0
    %300 = vmatprep.subr.mxu0 0.0
    %301 = vmatpush1.msra.mxu0 0.0
    %302 = vmatprep.subr.mxu0 0.0
    %303 = vmatpush1.msra.mxu0 0.0
    %304 = vmatprep.subr.mxu0 0.0
    %305 = vmatpush1.msra.mxu0 0.0
    %306 = vmatprep.subr.mxu0 0.0
    %307 = vmatpush1.msra.mxu0 0.0
    %308 = vmatprep.subr.mxu0 0.0
    %309 = vmatpush1.msra.mxu0 0.0
    %310 = vmatprep.subr.mxu0 0.0
    %311 = vmatpush1.msra.mxu0 0.0
    %312 = vmatprep.subr.mxu0 0.0
    %313 = vmatpush1.msra.mxu0 0.0
    %314 = vmatprep.mubr.f32.mxu0 0.0
    %315 = vmatmul.mubr.f32.gmra.mrb[0].mxu0 %v244
    %v316 = vpop.f32.mrb[0].mxu0
    %v317 = vadd.f32 0.0, %v316
    %v318 = vpop.f32.mrb[0].mxu0
    %319 = vdwg.mxu0
    %v320 = vsel %vm210, %v317, 0.0
    %v321 = vrot.slane %v320, 4
    %v322 = vadd.f32 %v320, %v321
    %v323 = vrot.slane %v322, 2
    %v324 = vadd.f32 %v322, %v323
    %v325 = vrot.slane %v324, 1
    %v326 = vadd.f32 %v324, %v325
    %v327 = vmul.f32 %v326, %v107
    %v328 = vsub.f32 %v317, %v327
    %v329 = vmul.f32 %v328, %v328
    %v330 = vsel %vm210, %v329, 0.0
    %v331 = vrot.slane %v330, 4
    %v332 = vadd.f32 %v330, %v331
    %v333 = vrot.slane %v332, 2
    %v334 = vadd.f32 %v332, %v333
    %v335 = vrot.slane %v334, 1
    %v336 = vadd.f32 %v334, %v335
    %v337 = vmul.f32 %v336, %v107
    %v338 = vadd.f32 %v337, 1e-05
    %v339 = vrsqrt.pop %v338
    %v340 = vmul.f32 %v24, %v339
    %v341 = vlaneseq
    %v342 = vshrl.u32 %v341, 7
    %v343 = vsub.s32 6, %v342
    %v344 = vrot.slane %v340, %v343
    %v345 = vmul.f32 %v328, %v344
    %v346 = vlaneseq
    %v347 = vshrl.u32 %v346, 7
    %v348 = vsub.s32 7, %v347
    %v349 = vrot.slane %v24, %v348
    %v350 = vadd.f32 %v345, %v349
    %v351 = vsel %vm210, %v350, -inf
    %352 = vmax.xlane.f32.xlu0 %v351
    %v353 = vpop.xlane.xlu0 %352
    %v354 = vsub.f32 %v350, %v353
    %v355 = vmul.f32 %v354, 1.442695
    %v356 = vpow.pop %v355
    %v357 = vsel %vm210, %v356, 0.0
    %358 = vadd.xlane.f32.xlu0 %v357
    %v359 = vpop.xlane.xlu0 %358
    %v360 = vrcp.pop %v359
    %v361 = vmul.f32 %v359, %v360
    %v362 = vsub.f32 2.0, %v361
    %v363 = vmul.f32 %v360, %v362
    %v364 = vmul.f32 %v356, %v363
    %365 = vst.msk [vmem:[#allocation2] sm:$0xff] %vm210, %v364
    // Predicated region
    $region10: #{classifier_forward.1} parent=1 // pred_check
      _
    $region11: #{classifier_forward.1} parent=1 // pred_check_branch
      %367 = sbr.rel (0) target = $region13
    $region12: #{classifier_forward.1} parent=1 // pred_region
      %s369 = ssub.s32 128, 128
      %370 = vsyncadd [#allocation3], %s369
      %s372 = sshll.u32 [#allocation2], 4
      %s373 = int_to_ptr.vmem [resolvable:$true] %s372
      %375 = dma.vmem_to_hbm [thread:$0]  %s373, 128, %s2, [#allocation3]
    $region13: #{classifier_forward.1} parent=1 // pred_fallthru
      _
    // Predicated region
    $region14: #{classifier_forward.1} parent=1 // pred_check
      _
    $region15: #{classifier_forward.1} parent=1 // pred_check_branch
      %377 = sbr.rel (0) target = $region17
    $region16: #{classifier_forward.1} parent=1 // pred_region
      %378 = dma.done [#allocation3], 128
    $region17: #{classifier_forward.1} parent=1 // pred_fallthru
      _
    %379 = vsyncpa [#allocation3], 1

</llo_original>
